<compile_context>
chip_gen: v7x
topology: tpu7x:2x2x1
jax: 0.10.0
libtpu: 0.0.40
codegen_flags: <defaults>
</compile_context>

<pallas_src>
import jax
import jax.numpy as jnp
from jax.experimental import pallas as pl
from jax.experimental.pallas import tpu as pltpu


_MAX_INFLIGHT_DMAS = 8          # cap on concurrent chunked copies
_MIN_BYTES_PER_CHUNK = 1 << 20  # ~1 MiB per DMA before it is worth splitting


def _make_dma_copy_kernel(chunks):
    """Build a kernel that copies `x` to `o` via chunked HBM->HBM DMAs.

    `chunks` is a static tuple of (start, size) slices along dim 0.
    """

    def kernel(x_hbm, o_hbm, sems):
        copies = []
        # Issue every chunk first (all DMAs in flight), then wait on all of
        # them.  Starts/sizes are static Python ints, so slicing is free.
        for idx, (start, size) in enumerate(chunks):
            cp = pltpu.make_async_copy(
                x_hbm.at[pl.ds(start, size)],
                o_hbm.at[pl.ds(start, size)],
                sems.at[idx],
            )
            cp.start()
            copies.append(cp)
        for cp in copies:
            cp.wait()

    return kernel


def _pallas_copy(x):
    """Identity copy of `x` (any shape/dtype) through a Pallas HBM->HBM DMA."""
    n0 = x.shape[0]
    bytes_total = x.size * jnp.dtype(x.dtype).itemsize

    # Choose the number of concurrent DMAs: one per ~1 MiB, capped at
    # _MAX_INFLIGHT_DMAS and at the leading-dim extent.  Small inputs use a
    # single whole-buffer DMA.
    nchunks = int(max(1, min(n0, _MAX_INFLIGHT_DMAS,
                             bytes_total // _MIN_BYTES_PER_CHUNK)))

    base, rem = divmod(n0, nchunks)
    chunks = []
    start = 0
    for i in range(nchunks):
        size = base + (1 if i < rem else 0)
        chunks.append((start, size))
        start += size
    chunks = tuple(chunks)

    return pl.pallas_call(
        _make_dma_copy_kernel(chunks),
        out_shape=jax.ShapeDtypeStruct(x.shape, x.dtype),
        in_specs=[pl.BlockSpec(memory_space=pl.ANY)],   # raw HBM ref, no auto-DMA
        out_specs=pl.BlockSpec(memory_space=pl.ANY),    # raw HBM ref, no auto-DMA
        scratch_shapes=[pltpu.SemaphoreType.DMA((nchunks,))],
    )(x)


class Reshape:
    """JAX/Pallas equivalent of the PyTorch Reshape(nn.Module)."""

    def __init__(self, *args):
        self.shape = args  # target shape; may contain -1 (torch .view semantics)

    def __call__(self, x):
        # Degenerate cases where a DMA copy is meaningless: pure metadata.
        if x.ndim == 0 or x.size == 0:
            return jnp.reshape(x, self.shape)
        # Move the bytes through the Pallas DMA kernel, then apply the target
        # view shape as free metadata (exactly like torch .view on contiguous x).
        out = _pallas_copy(x)
        return jnp.reshape(out, self.shape)


if __name__ == "__main__":
    key = jax.random.PRNGKey(0)
    # Small NCHW-style input consistent with typical use of Reshape.
    x = jax.random.normal(key, (2, 4, 16, 16), dtype=jnp.float32)

    # Reshape module: flatten the per-sample feature map, i.e. view to (2, 1024).
    module = Reshape(2, 4 * 16 * 16)
    y = module(x)
    jax.block_until_ready(y)

    # Verify semantics against the pure-JAX reference (torch .view == contiguous reshape).
    y_ref = x.reshape(2, 4 * 16 * 16)
    assert y.shape == y_ref.shape, (y.shape, y_ref.shape)
    assert y.dtype == y_ref.dtype
    assert bool(jnp.all(y == y_ref))

    # Also exercise a -1 style view like torch allows.
    module2 = Reshape(-1, 16, 16)
    y2 = module2(x)
    jax.block_until_ready(y2)
    assert y2.shape == (8, 16, 16)
    assert bool(jnp.all(y2 == x.reshape(-1, 16, 16)))

    # Dtype generality (the DMA path is byte-level, no sublane-packing concerns).
    xb = x.astype(jnp.bfloat16)
    y3 = Reshape(2, -1)(xb)
    jax.block_until_ready(y3)
    assert y3.shape == (2, 1024) and y3.dtype == jnp.bfloat16
    assert bool(jnp.all(y3 == xb.reshape(2, -1)))

    print("KERNEL_OK")
</pallas_src>

<mosaic_0001>
module attributes {stable_mosaic.version = 11 : i64} {
  func.func @kernel(%arg0: memref<2x4x16x16xf32, #tpu.memory_space<any>>, %arg1: memref<2x4x16x16xf32, #tpu.memory_space<any>>, %arg2: memref<1x!tpu.dma_semaphore, #tpu.memory_space<semaphore_mem>>) attributes {dimension_semantics = [], scalar_prefetch = 0 : i64, scratch_operands = 1 : i64, tpu.core_type = #tpu.core_type<tc>} {
    %c0_i32 = arith.constant 0 : i32
    %c0_i32_0 = arith.constant 0 : i32
    %c0_i32_1 = arith.constant 0 : i32
    %c0_i32_2 = arith.constant 0 : i32
    %c0_i32_3 = arith.constant 0 : i32
    %0 = tpu.memref_slice %arg0[%c0_i32_0, %c0_i32_1, %c0_i32_2, %c0_i32_3] : memref<2x4x16x16xf32, #tpu.memory_space<any>> -> memref<2x4x16x16xf32, #tpu.memory_space<any>>
    %c0_i32_4 = arith.constant 0 : i32
    %c0_i32_5 = arith.constant 0 : i32
    %c0_i32_6 = arith.constant 0 : i32
    %c0_i32_7 = arith.constant 0 : i32
    %1 = tpu.memref_slice %arg1[%c0_i32_4, %c0_i32_5, %c0_i32_6, %c0_i32_7] : memref<2x4x16x16xf32, #tpu.memory_space<any>> -> memref<2x4x16x16xf32, #tpu.memory_space<any>>
    %2 = tpu.memref_slice %arg2[%c0_i32] : memref<1x!tpu.dma_semaphore, #tpu.memory_space<semaphore_mem>> -> memref<1x!tpu.dma_semaphore, #tpu.memory_space<semaphore_mem>>
    %3 = tpu.memref_squeeze %2 : memref<1x!tpu.dma_semaphore, #tpu.memory_space<semaphore_mem>> -> memref<!tpu.dma_semaphore, #tpu.memory_space<semaphore_mem>>
    tpu.enqueue_dma source(%0 : memref<2x4x16x16xf32, #tpu.memory_space<any>>) target(%1 : memref<2x4x16x16xf32, #tpu.memory_space<any>>) target_semaphore(%3 : memref<!tpu.dma_semaphore, #tpu.memory_space<semaphore_mem>>)
    %c0_i32_8 = arith.constant 0 : i32
    %c0_i32_9 = arith.constant 0 : i32
    %c0_i32_10 = arith.constant 0 : i32
    %c0_i32_11 = arith.constant 0 : i32
    %c0_i32_12 = arith.constant 0 : i32
    %4 = tpu.memref_slice %arg0[%c0_i32_9, %c0_i32_10, %c0_i32_11, %c0_i32_12] : memref<2x4x16x16xf32, #tpu.memory_space<any>> -> memref<2x4x16x16xf32, #tpu.memory_space<any>>
    %c0_i32_13 = arith.constant 0 : i32
    %c0_i32_14 = arith.constant 0 : i32
    %c0_i32_15 = arith.constant 0 : i32
    %c0_i32_16 = arith.constant 0 : i32
    %5 = tpu.memref_slice %arg1[%c0_i32_13, %c0_i32_14, %c0_i32_15, %c0_i32_16] : memref<2x4x16x16xf32, #tpu.memory_space<any>> -> memref<2x4x16x16xf32, #tpu.memory_space<any>>
    %6 = tpu.memref_slice %arg2[%c0_i32_8] : memref<1x!tpu.dma_semaphore, #tpu.memory_space<semaphore_mem>> -> memref<1x!tpu.dma_semaphore, #tpu.memory_space<semaphore_mem>>
    %7 = tpu.memref_squeeze %6 : memref<1x!tpu.dma_semaphore, #tpu.memory_space<semaphore_mem>> -> memref<!tpu.dma_semaphore, #tpu.memory_space<semaphore_mem>>
    tpu.wait_dma2 semaphore(%7 : memref<!tpu.dma_semaphore, #tpu.memory_space<semaphore_mem>>) src(%4 : memref<2x4x16x16xf32, #tpu.memory_space<any>>) dst(%5 : memref<2x4x16x16xf32, #tpu.memory_space<any>>)
    return
  }
}

</mosaic_0001>

<llo_original>
// kernel: tpu_custom_call.1
$region0: #{tpu_custom_call.1}
  #allocation0 [shape = 'u32[]', space=smem, size = 0x4, offset = 0x4, fixed_abs, tag = 'smem constant byte address 0x4 - core index']
  #allocation1 [shape = 'u32[144,128]{1,0:T(1,128)}', space=vmem, size = 0x12000, scoped, tag = 'internal scratch']
  #allocation2 [shape = 's32[1]{0}', space=sflag, size = 0x4, scoped, tag = 'scratch operand']
  #allocation3 [shape = 's32[]', space=sflag, size = 0x4, offset = 0, fixed_abs, tag = 'sflag constant byte address 0x0 - dummy sync flag']
  #allocation4 [shape = 'u32[0]{0}', space=smem, size = 0, offset = 0, fixed_abs, tag = 'smem constant byte address 0x0 - null']
  %s0 = inlined_call_operand.hbm [shape: f32[2,4,16,16], index: 0, kind: input, shape index: {}]
  %s1 = inlined_call_operand.hbm [shape: f32[2,4,16,16], index: 1, kind: output, shape index: {}]
  %s2 = sld [smem:[#allocation0]]
  $region2: #{tpu_custom_call.1} parent=0
    _
  %s4 = ssub.s32 1, %s2
  %s5 = scalar_select 0, %s4, %s2
  %s7 = sshll.u32 1, 14
  %s8 = sxor.u32 4294967295, %s7
  %s11 = sshll.u32 3, 24
  %s12 = sxor.u32 4294967295, %s11
  %s13 = sand.u32 0, %s12
  %s15 = sor.u32 %s13, 0
  %18 = dma.general %s0, 2048, %s1, [#allocation2], [#allocation3], [#allocation4], %s15, 0
  %s19 = smul.u32 2, 4
  %s20 = smul.u32 %s19, 16
  %s21 = smul.u32 %s20, 1
  %s22 = sshll.u32 %s21, 4
  %23 = dma.done [#allocation2], %s22
  %24 = vsyncmov [#allocation2]
  %s25 = vpop.sfrf %24
  %p26 = scmp.eq.s32.totalorder %s25, 0
  %p27 = pneg %p26
  %29 = shalt.err (%p27)

</llo_original>
